<compile_context>
chip_gen: v7x
topology: tpu7x:2x2x1
jax: 0.10.0
libtpu: 0.0.40
codegen_flags: <defaults>
</compile_context>

<pallas_src>
import functools

import jax
import jax.numpy as jnp
from jax.experimental import pallas as pl
from jax.experimental.pallas import tpu as pltpu

LANE = 128
_MAX_BLOCK_BYTES = 1 << 20  # ~1 MiB of input dtype per block per operand


def _round_up(x, m):
    return ((x + m - 1) // m) * m


def _sq_err_kernel(pred_ref, gt_ref, out_ref, *, tile_rows, total_rows,
                   needs_mask):
    """Accumulate sum((pred - gt)^2) into the resident (8, 128) output block.

    Grid = (splits, steps_per_split): axis 0 is "parallel" (per-TensorCore
    row-range split on v7x), axis 1 is the serial reduction axis across which
    the output block stays resident in VMEM and acts as the accumulator.
    """
    i = pl.program_id(1)

    @pl.when(i == 0)
    def _():
        out_ref[...] = jnp.zeros_like(out_ref)

    diff = pred_ref[...].astype(jnp.float32) - gt_ref[...].astype(jnp.float32)
    sq = diff * diff

    if needs_mask:
        # Zero rows past the true slab extent (partial / duplicated tail
        # blocks).  jnp.where is a select, so OOB garbage (even NaN/Inf) is
        # discarded, never propagated.  Pure VPU work that hides under DMA.
        base = (pl.program_id(0) * pl.num_programs(1) + i) * tile_rows
        row_in_block = jax.lax.broadcasted_iota(jnp.int32, (tile_rows, LANE), 0)
        sq = jnp.where(row_in_block < (total_rows - base), sq, 0.0)

    # Fold the (tile_rows, LANE) block into the vreg-shaped (8, LANE) output:
    # contiguous reshape + elementwise vreg adds only (no XLU).
    out_ref[...] += sq.reshape(tile_rows // 8, 8, LANE).sum(axis=0)


def recon_loss(pred, gt, scale_recon_loss):
    """scale * MSE(pred, gt), matching torch.nn.MSELoss (mean reduction)."""
    assert pred.shape == gt.shape, (pred.shape, gt.shape)
    if gt.dtype != pred.dtype:
        gt = gt.astype(pred.dtype)
    n_elems = pred.size
    itemsize = jnp.dtype(pred.dtype).itemsize

    flat_p = pred.reshape(-1)
    flat_g = gt.reshape(-1)

    # ~1 MiB of the input dtype per block; always a multiple of 32 rows so the
    # block shape is legal for f32 / bf16 / 8-bit sublane packing.
    max_tile_rows = max(32, _MAX_BLOCK_BYTES // (LANE * itemsize))

    rows_raw = pl.cdiv(n_elems, LANE)
    if rows_raw <= max_tile_rows:
        # Small input: a single full-array block.  Round rows to a multiple of
        # 8 so the in-kernel (.., 8, LANE) fold is legal; pad is < 1024 elems.
        rows = _round_up(rows_raw, 8)
        tile_rows = rows
    else:
        # Large input: fixed ~1 MiB row tile; the last partial block is masked
        # in-kernel instead of jnp.pad-ing (and re-streaming) the big tensors.
        rows = rows_raw
        tile_rows = max_tile_rows

    padded_len = rows * LANE
    pad = padded_len - n_elems
    if pad:
        # Lane-alignment pad only; identical zero padding on both inputs
        # contributes exactly 0 to the squared-difference sum.
        flat_p = jnp.pad(flat_p, (0, pad))
        flat_g = jnp.pad(flat_g, (0, pad))
    slab_p = flat_p.reshape(rows, LANE)
    slab_g = flat_g.reshape(rows, LANE)

    num_blocks = pl.cdiv(rows, tile_rows)
    num_splits = 2 if num_blocks >= 2 else 1      # v7x: one row range per TC
    steps_per_split = pl.cdiv(num_blocks, num_splits)
    needs_mask = (num_splits * steps_per_split * tile_rows) != rows

    def in_index(s, i):
        # Clamp so duplicated tail blocks stay in bounds; their contribution
        # is zeroed by the in-kernel row mask.
        return (jnp.minimum(s * steps_per_split + i, num_blocks - 1), 0)

    kernel = functools.partial(
        _sq_err_kernel,
        tile_rows=tile_rows,
        total_rows=rows,
        needs_mask=needs_mask,
    )

    out = pl.pallas_call(
        kernel,
        out_shape=jax.ShapeDtypeStruct((num_splits * 8, LANE), jnp.float32),
        grid_spec=pltpu.PrefetchScalarGridSpec(
            num_scalar_prefetch=0,
            grid=(num_splits, steps_per_split),
            in_specs=[
                pl.BlockSpec((tile_rows, LANE), in_index),
                pl.BlockSpec((tile_rows, LANE), in_index),
            ],
            # Each split accumulates into its own lane-aligned (8, LANE)
            # output block, resident in VMEM across the serial axis.
            out_specs=pl.BlockSpec((8, LANE), lambda s, i: (s, 0)),
        ),
        compiler_params=pltpu.CompilerParams(
            dimension_semantics=("parallel", "arbitrary"),
        ),
    )(slab_p, slab_g)

    # Final tiny cross-lane reduce + mean + loss scale outside the kernel:
    # the compiled kernel does not specialize on scale_recon_loss.
    return jnp.sum(out) * (jnp.float32(scale_recon_loss) / n_elems)


if __name__ == "__main__":
    # config.scale_recon_loss -- deterministic synthetic value.
    scale_recon_loss = 0.5

    key = jax.random.PRNGKey(0)
    k1, k2, k3, k4, k5, k6 = jax.random.split(key, 6)

    # 1) Small NCHW point-value tensors (single-block path).
    pred = jax.random.normal(k1, (2, 4, 16, 16), dtype=jnp.float32)
    gt = jax.random.normal(k2, (2, 4, 16, 16), dtype=jnp.float32)
    loss = recon_loss(pred, gt, scale_recon_loss)
    jax.block_until_ready(loss)
    ref = scale_recon_loss * jnp.mean((pred - gt) ** 2)
    assert jnp.allclose(loss, ref, rtol=1e-5, atol=1e-6), (loss, ref)

    # 2) Ragged element count (exercises the small lane-alignment pad).
    p2 = jax.random.normal(k3, (3, 5, 7, 11), dtype=jnp.float32)
    g2 = jax.random.normal(k4, (3, 5, 7, 11), dtype=jnp.float32)
    loss2 = recon_loss(p2, g2, 1.25)
    jax.block_until_ready(loss2)
    ref2 = 1.25 * jnp.mean((p2 - g2) ** 2)
    assert jnp.allclose(loss2, ref2, rtol=1e-5, atol=1e-6), (loss2, ref2)

    # 3) bf16 input large enough to take the multi-block / core-split path
    #    with an in-kernel masked tail block (no wrapper upcast or pad).
    p3 = jax.random.normal(k5, (4, 8, 128, 130), dtype=jnp.bfloat16)
    g3 = jax.random.normal(k6, (4, 8, 128, 130), dtype=jnp.bfloat16)
    loss3 = recon_loss(p3, g3, 0.37)
    jax.block_until_ready(loss3)
    d3 = p3.astype(jnp.float32) - g3.astype(jnp.float32)
    ref3 = 0.37 * jnp.mean(d3 * d3)
    assert jnp.allclose(loss3, ref3, rtol=1e-4, atol=1e-6), (loss3, ref3)

    print("KERNEL_OK")
</pallas_src>

<mosaic_0001>
module attributes {stable_mosaic.version = 11 : i64} {
  func.func @_sq_err_kernel(%arg0: i32, %arg1: i32, %arg2: memref<16x128xf32, #tpu.memory_space<vmem>>, %arg3: memref<16x128xf32, #tpu.memory_space<vmem>>, %arg4: memref<8x128xf32, #tpu.memory_space<vmem>>) attributes {dimension_semantics = [#tpu.dimension_semantics<parallel>, #tpu.dimension_semantics<arbitrary>], iteration_bounds = array<i64: 1, 1>, scalar_prefetch = 0 : i64, scratch_operands = 0 : i64, tpu.core_type = #tpu.core_type<tc>, window_params = [{transform_indices = @transform_0, window_bounds = array<i64: 16, 128>}, {transform_indices = @transform_1, window_bounds = array<i64: 16, 128>}, {transform_indices = @transform_2, window_bounds = array<i64: 8, 128>}]} {
    %c0_i32 = arith.constant 0 : i32
    %0 = arith.cmpi eq, %arg1, %c0_i32 : i32
    %1 = arith.extui %0 : i1 to i32
    %c0_i32_0 = arith.constant 0 : i32
    %2 = arith.cmpi ne, %1, %c0_i32_0 : i32
    scf.if %2 {
      %cst_8 = arith.constant 0.000000e+00 : f32
      %12 = vector.broadcast %cst_8 : f32 to vector<8x128xf32>
      %c0_9 = arith.constant 0 : index
      %c0_10 = arith.constant 0 : index
      %13 = vector.load %arg4[%c0_9, %c0_10] : memref<8x128xf32, #tpu.memory_space<vmem>>, vector<8x128xf32>
      tpu.vector_store %arg4[%c0_9, %c0_10], %12 {strides = array<i32>} : memref<8x128xf32, #tpu.memory_space<vmem>>, vector<8x128xf32>,
    } else {
    }
    %c0 = arith.constant 0 : index
    %c0_1 = arith.constant 0 : index
    %3 = vector.load %arg2[%c0, %c0_1] : memref<16x128xf32, #tpu.memory_space<vmem>>, vector<16x128xf32>
    %c0_2 = arith.constant 0 : index
    %c0_3 = arith.constant 0 : index
    %4 = vector.load %arg3[%c0_2, %c0_3] : memref<16x128xf32, #tpu.memory_space<vmem>>, vector<16x128xf32>
    %5 = arith.subf %3, %4 : vector<16x128xf32>
    %6 = arith.mulf %5, %5 : vector<16x128xf32>
    %c0_4 = arith.constant 0 : index
    %c0_5 = arith.constant 0 : index
    %7 = vector.load %arg4[%c0_4, %c0_5] : memref<8x128xf32, #tpu.memory_space<vmem>>, vector<8x128xf32>
    %8 = vector.shape_cast %6 : vector<16x128xf32> to vector<2x8x128xf32>
    %cst = arith.constant dense<0.000000e+00> : vector<8x128xf32>
    %9 = vector.multi_reduction <add>, %8, %cst [0] : vector<2x8x128xf32> to vector<8x128xf32>
    %10 = arith.addf %7, %9 : vector<8x128xf32>
    %c0_6 = arith.constant 0 : index
    %c0_7 = arith.constant 0 : index
    %11 = vector.load %arg4[%c0_6, %c0_7] : memref<8x128xf32, #tpu.memory_space<vmem>>, vector<8x128xf32>
    tpu.vector_store %arg4[%c0_6, %c0_7], %10 {strides = array<i32>} : memref<8x128xf32, #tpu.memory_space<vmem>>, vector<8x128xf32>,
    return
  }
  func.func @transform_0(%arg0: i32, %arg1: i32) -> (i32, i32) {
    %c1_i32 = arith.constant 1 : i32
    %0 = arith.muli %arg0, %c1_i32 : i32
    %1 = arith.addi %0, %arg1 : i32
    %c0_i32 = arith.constant 0 : i32
    %2 = arith.minsi %1, %c0_i32 : i32
    %c0_i32_0 = arith.constant 0 : i32
    %c0_i32_1 = arith.constant 0 : i32
    return %2, %c0_i32_0 : i32, i32
  }
  func.func @transform_1(%arg0: i32, %arg1: i32) -> (i32, i32) {
    %c1_i32 = arith.constant 1 : i32
    %0 = arith.muli %arg0, %c1_i32 : i32
    %1 = arith.addi %0, %arg1 : i32
    %c0_i32 = arith.constant 0 : i32
    %2 = arith.minsi %1, %c0_i32 : i32
    %c0_i32_0 = arith.constant 0 : i32
    %c0_i32_1 = arith.constant 0 : i32
    return %2, %c0_i32_0 : i32, i32
  }
  func.func @transform_2(%arg0: i32, %arg1: i32) -> (i32, i32) {
    %c0_i32 = arith.constant 0 : i32
    %c0_i32_0 = arith.constant 0 : i32
    return %arg0, %c0_i32 : i32, i32
  }
}

</mosaic_0001>

<llo_original>
// kernel: tpu_custom_call.1
$region0: #{tpu_custom_call.1}
  #allocation0 [shape = 'u32[]', space=smem, size = 0x4, offset = 0x4, fixed_abs, tag = 'smem constant byte address 0x4 - core index']
  #allocation1 [shape = 'u32[144,128]{1,0:T(1,128)}', space=vmem, size = 0x12000, scoped, tag = 'internal scratch']
  %s0 = inlined_call_operand.hbm [shape: f32[16,128], index: 0, kind: input, shape index: {}]
  %s1 = inlined_call_operand.hbm [shape: f32[16,128], index: 1, kind: input, shape index: {}]
  %s2 = inlined_call_operand.hbm [shape: f32[8,128], index: 2, kind: output, shape index: {}]
  %s3 = sld [smem:[#allocation0]]
  $region30: #{tpu_custom_call.1} parent=0
    _
  %s5 = ssub.s32 1, %s3
  %s6 = scalar_select 0, %s5, %s3
  $region1: #{tpu_custom_call.1} parent=0
    #allocation2 [shape = 'u8[8192]{0}', space=vmem, size = 0x2000, scoped, tag = 'input window, operand 0, single buffered']
    #allocation3 [shape = 's32[1]{0}', space=sflag, size = 0x4, scoped, tag = 'scoped memory for tpu_custom_call.1']
    #allocation4 [shape = 's32[1]{0}', space=sflag, size = 0x4, scoped, tag = 'scoped memory for tpu_custom_call.1']
    #allocation5 [shape = 'u8[8192]{0}', space=vmem, size = 0x2000, scoped, tag = 'input window, operand 1, single buffered']
    #allocation6 [shape = 's32[1]{0}', space=sflag, size = 0x4, scoped, tag = 'scoped memory for tpu_custom_call.1']
    #allocation7 [shape = 'u8[4096]{0}', space=vmem, size = 0x1000, scoped, tag = 'output window, operand 0, single buffered']
    %7 = vsyncpa [#allocation3], 0
    %8 = vsyncpa [#allocation6], 0
    %9 = vsyncpa [#allocation4], 0
    // Predicated region
    $region2: #{tpu_custom_call.1} parent=1 // pred_check
      _
    $region3: #{tpu_custom_call.1} parent=1 // pred_check_branch
      %11 = sbr.rel (0) target = $region5
    $region4: #{tpu_custom_call.1} parent=1 // pred_region
      %s12 = sadd.s32 0, 0
      %p13 = scmp.lt.s32.totalorder %s12, 0
      %s14 = scalar_select %p13, %s12, 0
      %s15 = smul.u32 2, %s14
      %s17 = ssub.s32 256, 256
      %18 = vsyncadd [#allocation3], %s17
      %s19 = smul.addr %s15, 128
      %s20 = scalar_lea.hbm %s0, %s19
      %s21 = sshll.u32 [#allocation2], 4
      %s22 = int_to_ptr.vmem [resolvable:$true] %s21
      %27 = dma.hbm_to_vmem [thread:$0]  %s20, 256, %s22, [#allocation3], 128, 128, 8
    $region5: #{tpu_custom_call.1} parent=1 // pred_fallthru
      _
    // Predicated region
    $region6: #{tpu_custom_call.1} parent=1 // pred_check
      _
    $region7: #{tpu_custom_call.1} parent=1 // pred_check_branch
      %29 = sbr.rel (0) target = $region9
    $region8: #{tpu_custom_call.1} parent=1 // pred_region
      %s30 = sadd.s32 0, 0
      %p31 = scmp.lt.s32.totalorder %s30, 0
      %s32 = scalar_select %p31, %s30, 0
      %s33 = smul.u32 2, %s32
      %s35 = ssub.s32 256, 256
      %36 = vsyncadd [#allocation6], %s35
      %s37 = smul.addr %s33, 128
      %s38 = scalar_lea.hbm %s1, %s37
      %s39 = sshll.u32 [#allocation5], 4
      %s40 = int_to_ptr.vmem [resolvable:$true] %s39
      %45 = dma.hbm_to_vmem [thread:$0]  %s38, 256, %s40, [#allocation6], 128, 128, 8
    $region9: #{tpu_custom_call.1} parent=1 // pred_fallthru
      _
    // Predicated region
    $region10: #{tpu_custom_call.1} parent=1 // pred_check
      _
    $region11: #{tpu_custom_call.1} parent=1 // pred_check_branch
      %47 = sbr.rel (0) target = $region13
    $region12: #{tpu_custom_call.1} parent=1 // pred_region
      %48 = dma.done [#allocation3], 256
    $region13: #{tpu_custom_call.1} parent=1 // pred_fallthru
      _
    // Predicated region
    $region14: #{tpu_custom_call.1} parent=1 // pred_check
      _
    $region15: #{tpu_custom_call.1} parent=1 // pred_check_branch
      %50 = sbr.rel (0) target = $region17
    $region16: #{tpu_custom_call.1} parent=1 // pred_region
      %51 = dma.done [#allocation6], 256
    $region17: #{tpu_custom_call.1} parent=1 // pred_fallthru
      _
    %s52 = sadd.s32 0, 0
    %p53 = scmp.lt.s32.totalorder %s52, 0
    %s54 = scalar_select %p53, %s52, 0
    %s55 = smul.u32 2, %s54
    %s56 = sadd.s32 0, 0
    %p57 = scmp.lt.s32.totalorder %s56, 0
    %s58 = scalar_select %p57, %s56, 0
    %s59 = smul.u32 2, %s58
    %p60 = scmp.eq.s32.totalorder 0, 0
    // Predicated region
    $region18: #{tpu_custom_call.1} parent=1 // pred_check
      %p61 = pneg %p60
    $region19: #{tpu_custom_call.1} parent=1 // pred_check_branch
      %63 = sbr.rel (%p61) target = $region21
    $region20: #{tpu_custom_call.1} parent=1 // pred_region
      %64 = vst [vmem:[#allocation7] sm:$0xff] 0.0
    $region21: #{tpu_custom_call.1} parent=1 // pred_fallthru
      _
    %v65 = vld [vmem:[#allocation2] sm:$0xff]
    %v66 = vld [vmem:[#allocation2 + $0x8] sm:$0xff]
    %v67 = vld [vmem:[#allocation5] sm:$0xff]
    %v68 = vld [vmem:[#allocation5 + $0x8] sm:$0xff]
    %v69 = vsub.f32 %v65, %v67
    %v70 = vsub.f32 %v66, %v68
    %v71 = vmul.f32 %v69, %v69
    %v72 = vmul.f32 %v70, %v70
    %v73 = vld [vmem:[#allocation7] sm:$0xff]
    %v74 = vadd.f32 %v71, %v72
    %v75 = vadd.f32 %v73, %v74
    %76 = vst [vmem:[#allocation7] sm:$0xff] %v75
    // Predicated region
    $region22: #{tpu_custom_call.1} parent=1 // pred_check
      _
    $region23: #{tpu_custom_call.1} parent=1 // pred_check_branch
      %78 = sbr.rel (0) target = $region25
    $region24: #{tpu_custom_call.1} parent=1 // pred_region
      %s80 = ssub.s32 128, 128
      %81 = vsyncadd [#allocation4], %s80
      %s83 = sshll.u32 [#allocation7], 4
      %s84 = int_to_ptr.vmem [resolvable:$true] %s83
      %86 = dma.vmem_to_hbm [thread:$0]  %s84, 128, %s2, [#allocation4]
    $region25: #{tpu_custom_call.1} parent=1 // pred_fallthru
      _
    // Predicated region
    $region26: #{tpu_custom_call.1} parent=1 // pred_check
      _
    $region27: #{tpu_custom_call.1} parent=1 // pred_check_branch
      %88 = sbr.rel (0) target = $region29
    $region28: #{tpu_custom_call.1} parent=1 // pred_region
      %89 = dma.done [#allocation4], 128
    $region29: #{tpu_custom_call.1} parent=1 // pred_fallthru
      _
    %90 = vsyncpa [#allocation3], 1
    %91 = vsyncpa [#allocation6], 1
    %92 = vsyncpa [#allocation4], 1

</llo_original>
